<compile_context>
chip_gen: v6e
topology: v6e:2x2x1
jax: 0.10.0
libtpu: 0.0.40
codegen_flags: <defaults>
</compile_context>

<pallas_src>
import functools

import jax
import jax.numpy as jnp
from jax.experimental import pallas as pl
from jax.experimental.pallas import tpu as pltpu


def _round_up(x, m):
    return (x + m - 1) // m * m


def _vmem_bytes_per_step(th, *, W, cin, cout, out_itemsize):
    """Conservative per-grid-step VMEM estimate for block_h selection."""
    wp = W + 2
    kp = _round_up(3 * cin, 16)
    cout_p = _round_up(cout, 128)
    in_blk = th * wp * cin * 2                  # bf16 main block
    halo_blk = 2 * wp * cin * 2                 # top + bottom halo rows
    out_blk = th * W * cout * out_itemsize
    w_res = 3 * kp * cout_p * 2                 # resident weights (bf16)
    b_res = cout_p * 4                          # resident bias (f32)
    x_ext = (th + 2) * wp * cin * 2             # in-kernel halo concat copy
    x_cat = (th + 2) * W * kp * 2               # shifted slices + lane concat
    acc = th * W * cout_p * 4                   # f32 accumulator (+ epilogue temp)
    return (2 * (in_blk + halo_blk + out_blk + w_res + b_res)   # double-buffered pipeline
            + x_ext + 3 * x_cat + 2 * acc)


def _pick_block_h(N, H, W, cin, cout, out_itemsize, budget):
    divisors = [d for d in range(H, 0, -1) if H % d == 0]
    feasible = [d for d in divisors
                if _vmem_bytes_per_step(d, W=W, cin=cin, cout=cout,
                                        out_itemsize=out_itemsize) <= budget]
    if not feasible:
        feasible = [1]
    # Prefer an even total grid so v7x's two TensorCores get balanced work.
    for d in feasible:
        if (N * (H // d)) % 2 == 0:
            return d
    return feasible[0]


def convrelu_kernel(x_ref, top_ref, bot_ref, w_ref, b_ref, o_ref, *,
                    th, w_out, cin, kp, cout):
    """One (batch, row-tile) step.

    x_ref:   (1, TH, Wp, Cin)   bf16  -- non-overlapping main rows (W padded by 1)
    top_ref: (1, 1,  Wp, Cin)   bf16  -- row above the tile (clamped at boundary)
    bot_ref: (1, 1,  Wp, Cin)   bf16  -- row below the tile (clamped at boundary)
    w_ref:   (3, KP, COUT_P)    bf16  -- per-kh (kw,cin)-folded weights, K padded
    b_ref:   (1, COUT_P)        f32
    o_ref:   (1, TH, W, Cout)         -- compact, un-padded NHWC output block
    """
    h = pl.program_id(1)
    nh = pl.num_programs(1)

    main = x_ref[0]                                       # (TH, Wp, Cin)
    top = top_ref[0]                                      # (1,  Wp, Cin)
    bot = bot_ref[0]
    # The halo rows were fetched with a clamped row index purely so the
    # BlockSpec stays blocked / in-bounds; zero them at the image boundary
    # (this is the padding=1 behaviour along H).
    top = jnp.where(h > 0, top, jnp.zeros_like(top))
    bot = jnp.where(h < nh - 1, bot, jnp.zeros_like(bot))

    x_ext = jnp.concatenate([top, main, bot], axis=0)     # (TH+2, Wp, Cin)

    # kw shifts of the W window.  K layout is (kw, cin), zero-padded to KP
    # (multiple of 16) so the bf16 RHS sublane packing is unmasked.
    pieces = [x_ext[:, kw:kw + w_out, :] for kw in range(3)]
    if kp > 3 * cin:
        pieces.append(jnp.zeros((th + 2, w_out, kp - 3 * cin), dtype=x_ext.dtype))
    x_cat = jnp.concatenate(pieces, axis=-1)              # (TH+2, W, KP)

    # One accumulating MXU dot per kh row group (K = KP, N = COUT_P).  The kh
    # row selection is an outer-dim slice and the reshape is layout-preserving
    # because W % 8 == 0.
    acc = jnp.dot(x_cat[0:th].reshape(th * w_out, kp), w_ref[0],
                  preferred_element_type=jnp.float32)
    for kh in (1, 2):
        acc += jnp.dot(x_cat[kh:kh + th].reshape(th * w_out, kp), w_ref[kh],
                       preferred_element_type=jnp.float32)

    # f32 epilogue (bias + ReLU), drop Cout pad lanes, store compact NHWC.
    acc = jnp.maximum(acc + b_ref[...], 0.0)
    out = acc[:, :cout].reshape(th, w_out, cout)
    o_ref[0] = out.astype(o_ref.dtype)


@functools.partial(jax.jit, static_argnames=("block_h", "out_dtype", "vmem_limit"))
def _conv_relu_impl(x_nchw, weight_oihw, bias, *, block_h, out_dtype, vmem_limit):
    N, Cin, H, W = x_nchw.shape
    Cout = weight_oihw.shape[0]
    TH = block_h
    nH = H // TH
    Wp = W + 2
    KP = _round_up(3 * Cin, 16)
    COUT_P = _round_up(Cout, 128)
    out_itemsize = jnp.dtype(out_dtype).itemsize

    # NCHW -> NHWC bf16, pad W by 1 on each side (fuses with the transpose pass).
    x_nhwc = jnp.transpose(x_nchw, (0, 2, 3, 1)).astype(jnp.bfloat16)
    x_wpad = jnp.pad(x_nhwc, ((0, 0), (0, 0), (1, 1), (0, 0)))     # (N, H, Wp, Cin)

    # OIHW -> (kh, kw*Cin + ci, co); K padded to KP, Cout padded to COUT_P.
    # (For production Cout in (128, 256] on v6e/v7x, 256-wide N would fill the
    #  MXU in one pass; 128 granularity is kept here to stay v5e-friendly.)
    w_hwio = jnp.transpose(weight_oihw, (2, 3, 1, 0))               # (3, 3, Cin, Cout)
    w_mat = w_hwio.reshape(3, 3 * Cin, Cout)
    w_mat = jnp.pad(w_mat, ((0, 0), (0, KP - 3 * Cin), (0, COUT_P - Cout)))
    w_mat = w_mat.astype(jnp.bfloat16)
    b_mat = jnp.pad(bias.astype(jnp.float32), (0, COUT_P - Cout)).reshape(1, COUT_P)

    kernel = functools.partial(convrelu_kernel, th=TH, w_out=W, cin=Cin,
                               kp=KP, cout=Cout)

    flops = 2 * N * H * W * 9 * Cin * Cout
    bytes_accessed = (N * H * Wp * Cin * 2                 # activations (read ~once)
                      + 3 * KP * COUT_P * 2 + COUT_P * 4   # resident params
                      + N * H * W * Cout * out_itemsize)   # compact output

    out = pl.pallas_call(
        kernel,
        out_shape=jax.ShapeDtypeStruct((N, H, W, Cout), out_dtype),
        grid_spec=pltpu.PrefetchScalarGridSpec(
            num_scalar_prefetch=0,
            grid=(N, nH),
            in_specs=[
                # Non-overlapping main rows of the tile.
                pl.BlockSpec((1, TH, Wp, Cin), lambda n, h: (n, h, 0, 0)),
                # Single halo row above / below, clamped at the image boundary
                # (zero-masked inside the kernel).  Block size 1 on H => the
                # returned index is the row index itself.
                pl.BlockSpec((1, 1, Wp, Cin),
                             lambda n, h: (n, jnp.maximum(h * TH - 1, 0), 0, 0)),
                pl.BlockSpec((1, 1, Wp, Cin),
                             lambda n, h: (n, jnp.minimum((h + 1) * TH, H - 1), 0, 0)),
                # Resident weights / bias (constant block index -> fetched once;
                # the extra pipeline buffer is accounted for in the VMEM budget).
                pl.BlockSpec((3, KP, COUT_P), lambda n, h: (0, 0, 0)),
                pl.BlockSpec((1, COUT_P), lambda n, h: (0, 0)),
            ],
            out_specs=pl.BlockSpec((1, TH, W, Cout), lambda n, h: (n, h, 0, 0)),
        ),
        compiler_params=pltpu.CompilerParams(
            dimension_semantics=("parallel", "parallel"),
            vmem_limit_bytes=vmem_limit,
        ),
        cost_estimate=pl.CostEstimate(flops=int(flops), transcendentals=0,
                                      bytes_accessed=int(bytes_accessed)),
    )(x_wpad, x_wpad, x_wpad, w_mat, b_mat)

    # (N, H, W, Cout) -> NCHW to honor the PyTorch module contract.
    return jnp.transpose(out, (0, 3, 1, 2))


def conv_relu(x_nchw, weight_oihw, bias, *, block_h=None, out_dtype=jnp.bfloat16):
    """ConvRelu forward: NCHW input, PyTorch OIHW weight, (Cout,) bias -> NCHW."""
    N, Cin, H, W = x_nchw.shape
    Cout = weight_oihw.shape[0]
    # TODO(synk): pad W up to a multiple of 8 in the wrapper when needed; the
    # repo's production widths (e.g. 224/256) already satisfy this.
    assert W % 8 == 0, "W must be a multiple of 8 for layout-preserving reshapes"
    out_itemsize = jnp.dtype(out_dtype).itemsize

    try:
        vmem_cap = int(pltpu.get_tpu_info().vmem_capacity_bytes)
    except Exception:
        vmem_cap = 64 * 1024 * 1024                      # v7x-safe fallback
    vmem_limit = min(int(vmem_cap * 0.85), 100 * 1024 * 1024)

    if block_h is None:
        block_h = _pick_block_h(N, H, W, Cin, Cout, out_itemsize,
                                budget=int(vmem_limit * 0.7))
    assert H % block_h == 0, "block_h must divide H"
    return _conv_relu_impl(x_nchw, weight_oihw, bias, block_h=int(block_h),
                           out_dtype=out_dtype, vmem_limit=int(vmem_limit))


if __name__ == "__main__":
    key = jax.random.PRNGKey(0)
    k_x, k_w, k_b = jax.random.split(key, 3)

    N, Cin, H, W = 2, 4, 16, 16
    Cout = 8

    x = jax.random.normal(k_x, (N, Cin, H, W), dtype=jnp.float32)
    # Deterministic synthetic parameters (shapes match nn.Conv2d(Cin, Cout, 3)).
    weight = jax.random.normal(k_w, (Cout, Cin, 3, 3), dtype=jnp.float32) * 0.1
    bias = jax.random.normal(k_b, (Cout,), dtype=jnp.float32) * 0.1

    # block_h=8 -> 2 row tiles per image: exercises the clamped-halo fetch and
    # boundary zero-masking, and gives an even 4-step grid (v7x TC balance).
    out = jax.block_until_ready(conv_relu(x, weight, bias, block_h=8))

    # Reference: XLA conv on bf16-rounded operands (matches the bf16 MXU matmul
    # with f32 accumulation), + bias, ReLU.
    xr = x.astype(jnp.bfloat16).astype(jnp.float32)
    wr = weight.astype(jnp.bfloat16).astype(jnp.float32)
    ref = jax.lax.conv_general_dilated(
        xr, wr, window_strides=(1, 1), padding="SAME",
        dimension_numbers=("NCHW", "OIHW", "NCHW"),
    ) + bias[None, :, None, None]
    ref = jnp.maximum(ref, 0.0)

    assert out.shape == (N, Cout, H, W)
    out_f32 = out.astype(jnp.float32)
    err = float(jnp.max(jnp.abs(out_f32 - ref)))
    assert jnp.allclose(out_f32, ref, atol=3e-2, rtol=3e-2), err
    print("KERNEL_OK")
</pallas_src>

<mosaic_0001>
module attributes {stable_mosaic.version = 11 : i64} {
  func.func @convrelu_kernel(%arg0: i32, %arg1: i32, %arg2: memref<1x8x18x4xbf16, #tpu.memory_space<vmem>>, %arg3: memref<1x1x18x4xbf16, #tpu.memory_space<vmem>>, %arg4: memref<1x1x18x4xbf16, #tpu.memory_space<vmem>>, %arg5: memref<3x16x128xbf16, #tpu.memory_space<vmem>>, %arg6: memref<1x128xf32, #tpu.memory_space<vmem>>, %arg7: memref<1x8x16x8xbf16, #tpu.memory_space<vmem>>) attributes {dimension_semantics = [#tpu.dimension_semantics<parallel>, #tpu.dimension_semantics<parallel>], iteration_bounds = array<i64: 2, 2>, scalar_prefetch = 0 : i64, scratch_operands = 0 : i64, tpu.core_type = #tpu.core_type<tc>, window_params = [{transform_indices = @transform_0, window_bounds = array<i64: 1, 8, 18, 4>}, {transform_indices = @transform_1, window_bounds = array<i64: 1, 1, 18, 4>}, {transform_indices = @transform_2, window_bounds = array<i64: 1, 1, 18, 4>}, {pipeline_mode = #tpu.pipeline_mode<synchronous>, transform_indices = @transform_3, window_bounds = array<i64: 3, 16, 128>}, {pipeline_mode = #tpu.pipeline_mode<synchronous>, transform_indices = @transform_4, window_bounds = array<i64: 1, 128>}, {transform_indices = @transform_5, window_bounds = array<i64: 1, 8, 16, 8>}]} {
    %c0 = arith.constant 0 : index
    %c0_0 = arith.constant 0 : index
    %c0_1 = arith.constant 0 : index
    %c0_2 = arith.constant 0 : index
    %0 = vector.load %arg2[%c0, %c0_0, %c0_1, %c0_2] : memref<1x8x18x4xbf16, #tpu.memory_space<vmem>>, vector<1x8x18x4xbf16>
    %1 = vector.shape_cast %0 : vector<1x8x18x4xbf16> to vector<8x18x4xbf16>
    %c0_3 = arith.constant 0 : index
    %c0_4 = arith.constant 0 : index
    %c0_5 = arith.constant 0 : index
    %c0_6 = arith.constant 0 : index
    %2 = vector.load %arg3[%c0_3, %c0_4, %c0_5, %c0_6] : memref<1x1x18x4xbf16, #tpu.memory_space<vmem>>, vector<1x1x18x4xbf16>
    %3 = vector.shape_cast %2 : vector<1x1x18x4xbf16> to vector<1x18x4xbf16>
    %c0_7 = arith.constant 0 : index
    %c0_8 = arith.constant 0 : index
    %c0_9 = arith.constant 0 : index
    %c0_10 = arith.constant 0 : index
    %4 = vector.load %arg4[%c0_7, %c0_8, %c0_9, %c0_10] : memref<1x1x18x4xbf16, #tpu.memory_space<vmem>>, vector<1x1x18x4xbf16>
    %5 = vector.shape_cast %4 : vector<1x1x18x4xbf16> to vector<1x18x4xbf16>
    %c0_i32 = arith.constant 0 : i32
    %6 = arith.cmpi sgt, %arg1, %c0_i32 : i32
    %cst = arith.constant 0.000000e+00 : bf16
    %7 = vector.broadcast %cst : bf16 to vector<1x18x4xbf16>
    %8 = arith.select %6, %3, %7 : vector<1x18x4xbf16>
    %c1_i32 = arith.constant 1 : i32
    %9 = arith.cmpi slt, %arg1, %c1_i32 : i32
    %cst_11 = arith.constant 0.000000e+00 : bf16
    %10 = vector.broadcast %cst_11 : bf16 to vector<1x18x4xbf16>
    %11 = arith.select %9, %5, %10 : vector<1x18x4xbf16>
    %12 = tpu.concatenate %8, %1, %11 in 0 : vector<1x18x4xbf16>, vector<8x18x4xbf16>, vector<1x18x4xbf16> -> vector<10x18x4xbf16>
    %13 = vector.extract_strided_slice %12 {offsets = [0, 0, 0], sizes = [10, 16, 4], strides = [1, 1, 1]} : vector<10x18x4xbf16> to vector<10x16x4xbf16>
    %14 = vector.extract_strided_slice %12 {offsets = [0, 1, 0], sizes = [10, 16, 4], strides = [1, 1, 1]} : vector<10x18x4xbf16> to vector<10x16x4xbf16>
    %15 = vector.extract_strided_slice %12 {offsets = [0, 2, 0], sizes = [10, 16, 4], strides = [1, 1, 1]} : vector<10x18x4xbf16> to vector<10x16x4xbf16>
    %cst_12 = arith.constant 0.000000e+00 : bf16
    %16 = vector.broadcast %cst_12 : bf16 to vector<10x16x4xbf16>
    %17 = tpu.concatenate %13, %14, %15, %16 in 2 : vector<10x16x4xbf16>, vector<10x16x4xbf16>, vector<10x16x4xbf16>, vector<10x16x4xbf16> -> vector<10x16x16xbf16>
    %18 = vector.extract_strided_slice %17 {offsets = [0, 0, 0], sizes = [8, 16, 16], strides = [1, 1, 1]} : vector<10x16x16xbf16> to vector<8x16x16xbf16>
    %19 = vector.shape_cast %18 : vector<8x16x16xbf16> to vector<128x16xbf16>
    %c0_13 = arith.constant 0 : index
    %c0_14 = arith.constant 0 : index
    %c0_15 = arith.constant 0 : index
    %20 = vector.load %arg5[%c0_13, %c0_14, %c0_15] : memref<3x16x128xbf16, #tpu.memory_space<vmem>>, vector<1x16x128xbf16>
    %21 = vector.shape_cast %20 : vector<1x16x128xbf16> to vector<16x128xbf16>
    %cst_16 = arith.constant dense<0.000000e+00> : vector<128x128xf32>
    %22 = tpu.matmul %19, %21, %cst_16 {dimension_numbers = #tpu.dot_dimension_numbers<[1], [0], [0], [1], [0, 0, 1, 1], [], []>} : vector<128x16xbf16>, vector<16x128xbf16>, vector<128x128xf32> -> vector<128x128xf32>
    %23 = vector.extract_strided_slice %17 {offsets = [1, 0, 0], sizes = [8, 16, 16], strides = [1, 1, 1]} : vector<10x16x16xbf16> to vector<8x16x16xbf16>
    %24 = vector.shape_cast %23 : vector<8x16x16xbf16> to vector<128x16xbf16>
    %c1 = arith.constant 1 : index
    %c0_17 = arith.constant 0 : index
    %c0_18 = arith.constant 0 : index
    %25 = vector.load %arg5[%c1, %c0_17, %c0_18] : memref<3x16x128xbf16, #tpu.memory_space<vmem>>, vector<1x16x128xbf16>
    %26 = vector.shape_cast %25 : vector<1x16x128xbf16> to vector<16x128xbf16>
    %cst_19 = arith.constant dense<0.000000e+00> : vector<128x128xf32>
    %27 = tpu.matmul %24, %26, %cst_19 {dimension_numbers = #tpu.dot_dimension_numbers<[1], [0], [0], [1], [0, 0, 1, 1], [], []>} : vector<128x16xbf16>, vector<16x128xbf16>, vector<128x128xf32> -> vector<128x128xf32>
    %28 = arith.addf %22, %27 : vector<128x128xf32>
    %29 = vector.extract_strided_slice %17 {offsets = [2, 0, 0], sizes = [8, 16, 16], strides = [1, 1, 1]} : vector<10x16x16xbf16> to vector<8x16x16xbf16>
    %30 = vector.shape_cast %29 : vector<8x16x16xbf16> to vector<128x16xbf16>
    %c2 = arith.constant 2 : index
    %c0_20 = arith.constant 0 : index
    %c0_21 = arith.constant 0 : index
    %31 = vector.load %arg5[%c2, %c0_20, %c0_21] : memref<3x16x128xbf16, #tpu.memory_space<vmem>>, vector<1x16x128xbf16>
    %32 = vector.shape_cast %31 : vector<1x16x128xbf16> to vector<16x128xbf16>
    %cst_22 = arith.constant dense<0.000000e+00> : vector<128x128xf32>
    %33 = tpu.matmul %30, %32, %cst_22 {dimension_numbers = #tpu.dot_dimension_numbers<[1], [0], [0], [1], [0, 0, 1, 1], [], []>} : vector<128x16xbf16>, vector<16x128xbf16>, vector<128x128xf32> -> vector<128x128xf32>
    %34 = arith.addf %28, %33 : vector<128x128xf32>
    %c0_23 = arith.constant 0 : index
    %c0_24 = arith.constant 0 : index
    %35 = vector.load %arg6[%c0_23, %c0_24] : memref<1x128xf32, #tpu.memory_space<vmem>>, vector<1x128xf32>
    %36 = vector.broadcast %35 : vector<1x128xf32> to vector<128x128xf32>
    %37 = arith.addf %34, %36 : vector<128x128xf32>
    %cst_25 = arith.constant 0.000000e+00 : f32
    %38 = vector.broadcast %cst_25 : f32 to vector<128x128xf32>
    %39 = arith.maximumf %37, %38 : vector<128x128xf32>
    %40 = vector.extract_strided_slice %39 {offsets = [0, 0], sizes = [128, 8], strides = [1, 1]} : vector<128x128xf32> to vector<128x8xf32>
    %41 = vector.shape_cast %40 : vector<128x8xf32> to vector<8x16x8xf32>
    %42 = arith.truncf %41 : vector<8x16x8xf32> to vector<8x16x8xbf16>
    %c0_26 = arith.constant 0 : index
    %c0_27 = arith.constant 0 : index
    %c0_28 = arith.constant 0 : index
    %c0_29 = arith.constant 0 : index
    %43 = vector.load %arg7[%c0_26, %c0_27, %c0_28, %c0_29] : memref<1x8x16x8xbf16, #tpu.memory_space<vmem>>, vector<1x8x16x8xbf16>
    %44 = vector.shape_cast %43 : vector<1x8x16x8xbf16> to vector<8x16x8xbf16>
    %45 = vector.shape_cast %42 : vector<8x16x8xbf16> to vector<1x8x16x8xbf16>
    tpu.vector_store %arg7[%c0_26, %c0_27, %c0_28, %c0_29], %45 {strides = array<i32>} : memref<1x8x16x8xbf16, #tpu.memory_space<vmem>>, vector<1x8x16x8xbf16>,
    return
  }
  func.func @transform_0(%arg0: i32, %arg1: i32) -> (i32, i32, i32, i32) {
    %c0_i32 = arith.constant 0 : i32
    %c0_i32_0 = arith.constant 0 : i32
    %c0_i32_1 = arith.constant 0 : i32
    return %arg0, %arg1, %c0_i32, %c0_i32_0 : i32, i32, i32, i32
  }
  func.func @transform_1(%arg0: i32, %arg1: i32) -> (i32, i32, i32, i32) {
    %c8_i32 = arith.constant 8 : i32
    %0 = arith.muli %arg1, %c8_i32 : i32
    %c1_i32 = arith.constant 1 : i32
    %1 = arith.subi %0, %c1_i32 : i32
    %c0_i32 = arith.constant 0 : i32
    %2 = arith.maxsi %1, %c0_i32 : i32
    %c0_i32_0 = arith.constant 0 : i32
    %c0_i32_1 = arith.constant 0 : i32
    %c0_i32_2 = arith.constant 0 : i32
    return %arg0, %2, %c0_i32_0, %c0_i32_1 : i32, i32, i32, i32
  }
  func.func @transform_2(%arg0: i32, %arg1: i32) -> (i32, i32, i32, i32) {
    %c1_i32 = arith.constant 1 : i32
    %0 = arith.addi %arg1, %c1_i32 : i32
    %c8_i32 = arith.constant 8 : i32
    %1 = arith.muli %0, %c8_i32 : i32
    %c15_i32 = arith.constant 15 : i32
    %2 = arith.minsi %1, %c15_i32 : i32
    %c0_i32 = arith.constant 0 : i32
    %c0_i32_0 = arith.constant 0 : i32
    %c0_i32_1 = arith.constant 0 : i32
    return %arg0, %2, %c0_i32, %c0_i32_0 : i32, i32, i32, i32
  }
  func.func @transform_3(%arg0: i32, %arg1: i32) -> (i32, i32, i32) {
    %c0_i32 = arith.constant 0 : i32
    %c0_i32_0 = arith.constant 0 : i32
    %c0_i32_1 = arith.constant 0 : i32
    %c0_i32_2 = arith.constant 0 : i32
    return %c0_i32, %c0_i32_0, %c0_i32_1 : i32, i32, i32
  }
  func.func @transform_4(%arg0: i32, %arg1: i32) -> (i32, i32) {
    %c0_i32 = arith.constant 0 : i32
    %c0_i32_0 = arith.constant 0 : i32
    %c0_i32_1 = arith.constant 0 : i32
    return %c0_i32, %c0_i32_0 : i32, i32
  }
  func.func @transform_5(%arg0: i32, %arg1: i32) -> (i32, i32, i32, i32) {
    %c0_i32 = arith.constant 0 : i32
    %c0_i32_0 = arith.constant 0 : i32
    %c0_i32_1 = arith.constant 0 : i32
    return %arg0, %arg1, %c0_i32, %c0_i32_0 : i32, i32, i32, i32
  }
}

</mosaic_0001>

<llo_original>
// kernel: _conv_relu_impl.1
$region0: #{_conv_relu_impl.1}
  #allocation0 [shape = 'u32[]', space=smem, size = 0x4, offset = 0x4, fixed_abs, tag = 'smem constant byte address 0x4 - core index']
  #allocation1 [shape = 'u32[144,128]{1,0:T(1,128)}', space=vmem, size = 0x12000, scoped, tag = 'internal scratch']
  %s0 = inlined_call_operand.vmem [shape: bf16[2,16,18,4], index: 0, kind: input, shape index: {}, may-alias: {0,1,2}]
  %s1 = inlined_call_operand.vmem [shape: bf16[2,16,18,4], index: 1, kind: input, shape index: {}, may-alias: {0,1,2}]
  %s2 = inlined_call_operand.vmem [shape: bf16[2,16,18,4], index: 2, kind: input, shape index: {}, may-alias: {0,1,2}]
  %s3 = inlined_call_operand.vmem [shape: bf16[3,16,128], index: 3, kind: input, shape index: {}]
  %s4 = inlined_call_operand.vmem [shape: f32[1,128], index: 4, kind: input, shape index: {}]
  %s5 = inlined_call_operand.vmem [shape: bf16[2,16,16,8], index: 5, kind: output, shape index: {}]
  %s6 = sld [smem:[#allocation0]]
  $region53: #{_conv_relu_impl.1} parent=0
    _
  %s8 = ssub.s32 1, %s6
  %s9 = scalar_select 0, %s8, %s6
  loop: start=0, step=1, limit=6
  $region2: #{_conv_relu_impl.1} parent=0 // loop_pre_header
    _
  $region3: #{_conv_relu_impl.1} parent=0 // loop_header
    %s11 = sphi 0, %s15
    %p12 = scmp.ge.s32.totalorder %s11, 6
    %s18 = sphi 0, %s30
    %s19 = sphi 0, %s26
    %s20 = sphi 0, %s18
    %s21 = sphi 0, %s19
    %s22 = sphi 0, %s20
    %s23 = sphi 0, %s21
    %s35 = sphi 0, %s37
    %s38 = sphi 0, %s35
    %s39 = sphi 0, %s38
    %s55 = sphi 0, %s39
    %s71 = sphi 0, %s73
    %s74 = sphi 0, %s71
    %s75 = sphi 0, %s74
    %s91 = sphi 0, %s75
    %s107 = sphi 0, %s109
    %s110 = sphi 0, %s107
    %s111 = sphi 0, %s110
    %s127 = sphi 0, %s111
    %s131 = sphi 0, %s131
    %s133 = sphi 0, %s131
    %s134 = sphi 0, %s133
    %s148 = sphi 0, %s134
    %s152 = sphi 0, %s152
    %s154 = sphi 0, %s152
    %s155 = sphi 0, %s154
    %s169 = sphi 0, %s155
    %s177 = sphi 0, %s179
    %s180 = sphi 0, %s177
    %s181 = sphi 0, %s180
    %s197 = sphi 0, %s181
  $region4: #{_conv_relu_impl.1} parent=0 // loop_header_branch
    %14 = sbr.rel (%p12) target = $region8
  $region5: #{_conv_relu_impl.1} parent=0 // loop_body
    %s16 = ssub.s32 %s11, 1
    %s17 = ssub.s32 %s11, 2
    %s24 = sadd.s32 1, %s19
    %p25 = scmp.ge.s32.totalorder %s24, 2
    %s26 = scalar_select %p25, 0, %s24
    %s27 = sadd.s32 1, %s18
    %s28 = scalar_select %p25, %s27, %s18
    %p29 = scmp.ge.s32.totalorder %s28, 2
    %s30 = scalar_select %p29, 0, %s28
    %s31 = ssub.s32 %s18, %s30
    %s32 = ssub.s32 %s19, %s26
    %s33 = sor.u32 %s31, %s32
    %p34 = scmp.eq.s32.totalorder %s33, 0
    %s36 = sadd.s32 %s35, 1
    %s37 = scalar_select %p34, %s35, %s36
    %p40 = pneg %p34
    %p41 = scmp.eq.s32.totalorder %s11, 3
    %p42 = por %p40, %p41
    %p43 = scmp.ne.s32.totalorder %s35, %s38
    %p44 = scmp.eq.s32.totalorder %s11, 0
    %p45 = por %p43, %p44
    %p46 = scmp.ne.s32.totalorder %s35, %s38
    %p47 = scmp.eq.s32.totalorder %s16, 3
    %p48 = por %p46, %p47
    %p49 = scmp.ne.s32.totalorder %s38, %s39
    %p50 = scmp.eq.s32.totalorder %s16, 0
    %p51 = por %p49, %p50
    %p52 = scmp.ne.s32.totalorder %s38, %s39
    %p53 = scmp.eq.s32.totalorder %s17, 3
    %p54 = por %p52, %p53
    %p56 = scmp.ne.s32.totalorder %s39, %s55
    %p57 = scmp.eq.s32.totalorder %s17, 0
    %p58 = por %p56, %p57
    %s59 = smul.u32 %s19, 8
    %s60 = ssub.s32 %s59, 1
    %p61 = scmp.gt.s32.totalorder %s60, 0
    %s62 = scalar_select %p61, %s60, 0
    %s63 = smul.u32 %s26, 8
    %s64 = ssub.s32 %s63, 1
    %p65 = scmp.gt.s32.totalorder %s64, 0
    %s66 = scalar_select %p65, %s64, 0
    %s67 = ssub.s32 %s18, %s30
    %s68 = ssub.s32 %s62, %s66
    %s69 = sor.u32 %s67, %s68
    %p70 = scmp.eq.s32.totalorder %s69, 0
    %s72 = sadd.s32 %s71, 1
    %s73 = scalar_select %p70, %s71, %s72
    %p76 = pneg %p70
    %p77 = scmp.eq.s32.totalorder %s11, 3
    %p78 = por %p76, %p77
    %p79 = scmp.ne.s32.totalorder %s71, %s74
    %p80 = scmp.eq.s32.totalorder %s11, 0
    %p81 = por %p79, %p80
    %p82 = scmp.ne.s32.totalorder %s71, %s74
    %p83 = scmp.eq.s32.totalorder %s16, 3
    %p84 = por %p82, %p83
    %p85 = scmp.ne.s32.totalorder %s74, %s75
    %p86 = scmp.eq.s32.totalorder %s16, 0
    %p87 = por %p85, %p86
    %p88 = scmp.ne.s32.totalorder %s74, %s75
    %p89 = scmp.eq.s32.totalorder %s17, 3
    %p90 = por %p88, %p89
    %p92 = scmp.ne.s32.totalorder %s75, %s91
    %p93 = scmp.eq.s32.totalorder %s17, 0
    %p94 = por %p92, %p93
    %s95 = sadd.s32 %s19, 1
    %s96 = smul.u32 %s95, 8
    %p97 = scmp.lt.s32.totalorder %s96, 15
    %s98 = scalar_select %p97, %s96, 15
    %s99 = sadd.s32 %s26, 1
    %s100 = smul.u32 %s99, 8
    %p101 = scmp.lt.s32.totalorder %s100, 15
    %s102 = scalar_select %p101, %s100, 15
    %s103 = ssub.s32 %s18, %s30
    %s104 = ssub.s32 %s98, %s102
    %s105 = sor.u32 %s103, %s104
    %p106 = scmp.eq.s32.totalorder %s105, 0
    %s108 = sadd.s32 %s107, 1
    %s109 = scalar_select %p106, %s107, %s108
    %p112 = pneg %p106
    %p113 = scmp.eq.s32.totalorder %s11, 3
    %p114 = por %p112, %p113
    %p115 = scmp.ne.s32.totalorder %s107, %s110
    %p116 = scmp.eq.s32.totalorder %s11, 0
    %p117 = por %p115, %p116
    %p118 = scmp.ne.s32.totalorder %s107, %s110
    %p119 = scmp.eq.s32.totalorder %s16, 3
    %p120 = por %p118, %p119
    %p121 = scmp.ne.s32.totalorder %s110, %s111
    %p122 = scmp.eq.s32.totalorder %s16, 0
    %p123 = por %p121, %p122
    %p124 = scmp.ne.s32.totalorder %s110, %s111
    %p125 = scmp.eq.s32.totalorder %s17, 3
    %p126 = por %p124, %p125
    %p128 = scmp.ne.s32.totalorder %s111, %s127
    %p129 = scmp.eq.s32.totalorder %s17, 0
    %p130 = por %p128, %p129
    %s132 = sadd.s32 %s131, 1
    %p135 = scmp.eq.s32.totalorder %s11, 3
    %p136 = scmp.ne.s32.totalorder %s131, %s133
    %p137 = scmp.eq.s32.totalorder %s11, 0
    %p138 = por %p136, %p137
    %p139 = scmp.ne.s32.totalorder %s131, %s133
    %p140 = scmp.eq.s32.totalorder %s16, 3
    %p141 = por %p139, %p140
    %p142 = scmp.ne.s32.totalorder %s133, %s134
    %p143 = scmp.eq.s32.totalorder %s16, 0
    %p144 = por %p142, %p143
    %p145 = scmp.ne.s32.totalorder %s133, %s134
    %p146 = scmp.eq.s32.totalorder %s17, 3
    %p147 = por %p145, %p146
    %p149 = scmp.ne.s32.totalorder %s134, %s148
    %p150 = scmp.eq.s32.totalorder %s17, 0
    %p151 = por %p149, %p150
    %s153 = sadd.s32 %s152, 1
    %p156 = scmp.eq.s32.totalorder %s11, 3
    %p157 = scmp.ne.s32.totalorder %s152, %s154
    %p158 = scmp.eq.s32.totalorder %s11, 0
    %p159 = por %p157, %p158
    %p160 = scmp.ne.s32.totalorder %s152, %s154
    %p161 = scmp.eq.s32.totalorder %s16, 3
    %p162 = por %p160, %p161
    %p163 = scmp.ne.s32.totalorder %s154, %s155
    %p164 = scmp.eq.s32.totalorder %s16, 0
    %p165 = por %p163, %p164
    %p166 = scmp.ne.s32.totalorder %s154, %s155
    %p167 = scmp.eq.s32.totalorder %s17, 3
    %p168 = por %p166, %p167
    %p170 = scmp.ne.s32.totalorder %s155, %s169
    %p171 = scmp.eq.s32.totalorder %s17, 0
    %p172 = por %p170, %p171
    %s173 = ssub.s32 %s18, %s30
    %s174 = ssub.s32 %s19, %s26
    %s175 = sor.u32 %s173, %s174
    %p176 = scmp.eq.s32.totalorder %s175, 0
    %s178 = sadd.s32 %s177, 1
    %s179 = scalar_select %p176, %s177, %s178
    %p182 = pneg %p176
    %p183 = scmp.eq.s32.totalorder %s11, 3
    %p184 = por %p182, %p183
    %p185 = scmp.ne.s32.totalorder %s177, %s180
    %p186 = scmp.eq.s32.totalorder %s11, 0
    %p187 = por %p185, %p186
    %p188 = scmp.ne.s32.totalorder %s177, %s180
    %p189 = scmp.eq.s32.totalorder %s16, 3
    %p190 = por %p188, %p189
    %p191 = scmp.ne.s32.totalorder %s180, %s181
    %p192 = scmp.eq.s32.totalorder %s16, 0
    %p193 = por %p191, %p192
    %p194 = scmp.ne.s32.totalorder %s180, %s181
    %p195 = scmp.eq.s32.totalorder %s17, 3
    %p196 = por %p194, %p195
    %p198 = scmp.ne.s32.totalorder %s181, %s197
    %p199 = scmp.eq.s32.totalorder %s17, 0
    %p200 = por %p198, %p199
    %p201 = scmp.le.s32.totalorder 1, %s11
    %p202 = scmp.lt.s32.totalorder %s11, 5
    %p203 = pnand %p201, %p202
    %p204 = pneg %p203
    // Predicated region
    $region9: #{_conv_relu_impl.1} parent=5 // pred_check
      _
    $region10: #{_conv_relu_impl.1} parent=5 // pred_check_branch
      %206 = sbr.rel (%p203) target = $region12
    $region11: #{_conv_relu_impl.1} parent=5 // pred_region
      %s207 = ssub.s32 %s11, 1
      // Predicated region
      $region13: #{_conv_relu_impl.1} parent=11 // pred_check
        %p208 = pneg %p144
      $region14: #{_conv_relu_impl.1} parent=11 // pred_check_branch
        %210 = sbr.rel (%p208) target = $region16
      $region15: #{_conv_relu_impl.1} parent=11 // pred_region
        _
      $region16: #{_conv_relu_impl.1} parent=11 // pred_fallthru
        _
      // Predicated region
      $region17: #{_conv_relu_impl.1} parent=11 // pred_check
        %p211 = pneg %p165
      $region18: #{_conv_relu_impl.1} parent=11 // pred_check_branch
        %213 = sbr.rel (%p211) target = $region20
      $region19: #{_conv_relu_impl.1} parent=11 // pred_region
        _
      $region20: #{_conv_relu_impl.1} parent=11 // pred_fallthru
        _
    $region12: #{_conv_relu_impl.1} parent=5 // pred_fallthru
      _
    %p214 = scmp.lt.s32.totalorder %s11, 4
    // Predicated region
    $region21: #{_conv_relu_impl.1} parent=5 // pred_check
      %p215 = pneg %p214
    $region22: #{_conv_relu_impl.1} parent=5 // pred_check_branch
      %217 = sbr.rel (%p215) target = $region24
    $region23: #{_conv_relu_impl.1} parent=5 // pred_region
      // Predicated region
      $region25: #{_conv_relu_impl.1} parent=23 // pred_check
        %p218 = pneg %p45
      $region26: #{_conv_relu_impl.1} parent=23 // pred_check_branch
        %220 = sbr.rel (%p218) target = $region28
      $region27: #{_conv_relu_impl.1} parent=23 // pred_region
        %s221 = smul.u32 8, %s19
        %p222 = scmp.lt.s32.totalorder %s18, 1
        %s223 = scalar_select %p222, %s18, 1
        %p224 = scmp.lt.s32.totalorder %s221, 15
        %s225 = scalar_select %p224, %s221, 15
        %s226 = smul.addr %s225, 3
        %s227 = smul.addr %s223, 48
        %s228 = sadd.s32 %s226, %s227
        %s229 = smul.addr %s228, 4
        %s230 = scalar_lea.vmem %s0, %s229
        %s231 = smul.u32 8, %s19
      $region28: #{_conv_relu_impl.1} parent=23 // pred_fallthru
        _
      // Predicated region
      $region29: #{_conv_relu_impl.1} parent=23 // pred_check
        %p232 = pneg %p81
      $region30: #{_conv_relu_impl.1} parent=23 // pred_check_branch
        %234 = sbr.rel (%p232) target = $region32
      $region31: #{_conv_relu_impl.1} parent=23 // pred_region
        %s235 = smul.u32 %s19, 8
        %s236 = ssub.s32 %s235, 1
        %p237 = scmp.gt.s32.totalorder %s236, 0
        %s238 = scalar_select %p237, %s236, 0
        %p239 = scmp.lt.s32.totalorder %s18, 1
        %s240 = scalar_select %p239, %s18, 1
        %p241 = scmp.lt.s32.totalorder %s238, 15
        %s242 = scalar_select %p241, %s238, 15
        %s243 = smul.addr %s242, 3
        %s244 = smul.addr %s240, 48
        %s245 = sadd.s32 %s243, %s244
        %s246 = smul.addr %s245, 4
        %s247 = scalar_lea.vmem %s1, %s246
        %s248 = smul.u32 %s19, 8
        %s249 = ssub.s32 %s248, 1
        %p250 = scmp.gt.s32.totalorder %s249, 0
        %s251 = scalar_select %p250, %s249, 0
      $region32: #{_conv_relu_impl.1} parent=23 // pred_fallthru
        _
      // Predicated region
      $region33: #{_conv_relu_impl.1} parent=23 // pred_check
        %p252 = pneg %p117
      $region34: #{_conv_relu_impl.1} parent=23 // pred_check_branch
        %254 = sbr.rel (%p252) target = $region36
      $region35: #{_conv_relu_impl.1} parent=23 // pred_region
        %s255 = sadd.s32 %s19, 1
        %s256 = smul.u32 %s255, 8
        %p257 = scmp.lt.s32.totalorder %s256, 15
        %s258 = scalar_select %p257, %s256, 15
        %p259 = scmp.lt.s32.totalorder %s18, 1
        %s260 = scalar_select %p259, %s18, 1
        %p261 = scmp.lt.s32.totalorder %s258, 15
        %s262 = scalar_select %p261, %s258, 15
        %s263 = smul.addr %s262, 3
        %s264 = smul.addr %s260, 48
        %s265 = sadd.s32 %s263, %s264
        %s266 = smul.addr %s265, 4
        %s267 = scalar_lea.vmem %s2, %s266
        %s268 = sadd.s32 %s19, 1
        %s269 = smul.u32 %s268, 8
        %p270 = scmp.lt.s32.totalorder %s269, 15
        %s271 = scalar_select %p270, %s269, 15
      $region36: #{_conv_relu_impl.1} parent=23 // pred_fallthru
        _
    $region24: #{_conv_relu_impl.1} parent=5 // pred_fallthru
      _
    %p272 = scmp.le.s32.totalorder 1, %s11
    %p273 = scmp.lt.s32.totalorder %s11, 5
    %p274 = pnand %p272, %p273
    %p275 = pneg %p274
    // Predicated region
    $region37: #{_conv_relu_impl.1} parent=5 // pred_check
      _
    $region38: #{_conv_relu_impl.1} parent=5 // pred_check_branch
      %277 = sbr.rel (%p274) target = $region40
    $region39: #{_conv_relu_impl.1} parent=5 // pred_region
      %s278 = ssub.s32 %s11, 1
      %s279 = smul.u32 8, %s21
      %p280 = scmp.lt.s32.totalorder %s20, 1
      %s281 = scalar_select %p280, %s20, 1
      %p282 = scmp.lt.s32.totalorder %s279, 15
      %s283 = scalar_select %p282, %s279, 15
      %s284 = smul.addr %s283, 3
      %s285 = smul.addr %s281, 48
      %s286 = sadd.s32 %s284, %s285
      %s287 = smul.addr %s286, 4
      %s288 = scalar_lea.vmem %s0, %s287
      %p289 = pneg %p51
      %p290 = pneg %p48
      %s291 = smul.u32 %s21, 8
      %s292 = ssub.s32 %s291, 1
      %p293 = scmp.gt.s32.totalorder %s292, 0
      %s294 = scalar_select %p293, %s292, 0
      %p295 = scmp.lt.s32.totalorder %s20, 1
      %s296 = scalar_select %p295, %s20, 1
      %p297 = scmp.lt.s32.totalorder %s294, 15
      %s298 = scalar_select %p297, %s294, 15
      %s299 = smul.addr %s298, 3
      %s300 = smul.addr %s296, 48
      %s301 = sadd.s32 %s299, %s300
      %s302 = smul.addr %s301, 4
      %s303 = scalar_lea.vmem %s1, %s302
      %p304 = pneg %p87
      %p305 = pneg %p84
      %s306 = sadd.s32 %s21, 1
      %s307 = smul.u32 %s306, 8
      %p308 = scmp.lt.s32.totalorder %s307, 15
      %s309 = scalar_select %p308, %s307, 15
      %p310 = scmp.lt.s32.totalorder %s20, 1
      %s311 = scalar_select %p310, %s20, 1
      %p312 = scmp.lt.s32.totalorder %s309, 15
      %s313 = scalar_select %p312, %s309, 15
      %s314 = smul.addr %s313, 3
      %s315 = smul.addr %s311, 48
      %s316 = sadd.s32 %s314, %s315
      %s317 = smul.addr %s316, 4
      %s318 = scalar_lea.vmem %s2, %s317
      %p319 = pneg %p123
      %p320 = pneg %p120
      %p321 = pneg %p144
      %p322 = pneg %p141
      %p323 = pneg %p165
      %p324 = pneg %p162
      %p325 = pneg %p193
      %p326 = pneg %p190
      %s327 = smul.u32 8, %s21
      %p328 = scmp.lt.s32.totalorder %s20, 1
      %s329 = scalar_select %p328, %s20, 1
      %p330 = scmp.lt.s32.totalorder %s327, 15
      %s331 = scalar_select %p330, %s327, 15
      %s332 = smul.addr %s331, 2
      %s333 = smul.addr %s329, 32
      %s334 = sadd.s32 %s332, %s333
      %s335 = smul.addr %s334, 4
      %s336 = scalar_lea.vmem %s5, %s335
      %s337 = smul.u32 8, %s21
      %p338 = scmp.lt.s32.totalorder %s20, 1
      %s339 = scalar_select %p338, %s20, 1
      %p340 = scmp.lt.s32.totalorder %s337, 15
      %s341 = scalar_select %p340, %s337, 15
      %s342 = smul.addr %s341, 3
      %s343 = smul.addr %s339, 48
      %s344 = sadd.s32 %s342, %s343
      %s345 = smul.addr %s344, 4
      %s346 = scalar_lea.vmem %s0, %s345
      %s347 = smul.u32 8, %s21
      %s348 = smul.u32 %s21, 8
      %s349 = ssub.s32 %s348, 1
      %p350 = scmp.gt.s32.totalorder %s349, 0
      %s351 = scalar_select %p350, %s349, 0
      %p352 = scmp.lt.s32.totalorder %s20, 1
      %s353 = scalar_select %p352, %s20, 1
      %p354 = scmp.lt.s32.totalorder %s351, 15
      %s355 = scalar_select %p354, %s351, 15
      %s356 = smul.addr %s355, 3
      %s357 = smul.addr %s353, 48
      %s358 = sadd.s32 %s356, %s357
      %s359 = smul.addr %s358, 4
      %s360 = scalar_lea.vmem %s1, %s359
      %s361 = smul.u32 %s21, 8
      %s362 = ssub.s32 %s361, 1
      %p363 = scmp.gt.s32.totalorder %s362, 0
      %s364 = scalar_select %p363, %s362, 0
      %s365 = sadd.s32 %s21, 1
      %s366 = smul.u32 %s365, 8
      %p367 = scmp.lt.s32.totalorder %s366, 15
      %s368 = scalar_select %p367, %s366, 15
      %p369 = scmp.lt.s32.totalorder %s20, 1
      %s370 = scalar_select %p369, %s20, 1
      %p371 = scmp.lt.s32.totalorder %s368, 15
      %s372 = scalar_select %p371, %s368, 15
      %s373 = smul.addr %s372, 3
      %s374 = smul.addr %s370, 48
      %s375 = sadd.s32 %s373, %s374
      %s376 = smul.addr %s375, 4
      %s377 = scalar_lea.vmem %s2, %s376
      %s378 = sadd.s32 %s21, 1
      %s379 = smul.u32 %s378, 8
      %p380 = scmp.lt.s32.totalorder %s379, 15
      %s381 = scalar_select %p380, %s379, 15
      %s382 = smul.u32 8, %s21
      %p383 = scmp.lt.s32.totalorder %s20, 1
      %s384 = scalar_select %p383, %s20, 1
      %p385 = scmp.lt.s32.totalorder %s382, 15
      %s386 = scalar_select %p385, %s382, 15
      %s387 = smul.addr %s386, 2
      %s388 = smul.addr %s384, 32
      %s389 = sadd.s32 %s387, %s388
      %s390 = smul.addr %s389, 4
      %s391 = scalar_lea.vmem %s5, %s390
      %s392 = smul.u32 8, %s21
      %v394 = vld [vmem:[%s346] sm:$0xf]
      %v395 = vld [vmem:[%s346 + $0x4] sm:$0xf]
      %v396 = vld [vmem:[%s346 + $0x8] sm:$0x1]
      %v397 = vld [vmem:[%s346 + $0xc] sm:$0xf]
      %v398 = vld [vmem:[%s346 + $0x10] sm:$0xf]
      %v399 = vld [vmem:[%s346 + $0x14] sm:$0x1]
      %v400 = vld [vmem:[%s346 + $0x18] sm:$0xf]
      %v401 = vld [vmem:[%s346 + $0x1c] sm:$0xf]
      %v402 = vld [vmem:[%s346 + $0x20] sm:$0x1]
      %v403 = vld [vmem:[%s346 + $0x24] sm:$0xf]
      %v404 = vld [vmem:[%s346 + $0x28] sm:$0xf]
      %v405 = vld [vmem:[%s346 + $0x2c] sm:$0x1]
      %v406 = vld [vmem:[%s346 + $0x30] sm:$0xf]
      %v407 = vld [vmem:[%s346 + $0x34] sm:$0xf]
      %v408 = vld [vmem:[%s346 + $0x38] sm:$0x1]
      %v409 = vld [vmem:[%s346 + $0x3c] sm:$0xf]
      %v410 = vld [vmem:[%s346 + $0x40] sm:$0xf]
      %v411 = vld [vmem:[%s346 + $0x44] sm:$0x1]
      %v412 = vld [vmem:[%s346 + $0x48] sm:$0xf]
      %v413 = vld [vmem:[%s346 + $0x4c] sm:$0xf]
      %v414 = vld [vmem:[%s346 + $0x50] sm:$0x1]
      %v415 = vld [vmem:[%s346 + $0x54] sm:$0xf]
      %v416 = vld [vmem:[%s346 + $0x58] sm:$0xf]
      %v417 = vld [vmem:[%s346 + $0x5c] sm:$0x1]
      %v418 = vld [vmem:[%s360] sm:$0xf]
      %v419 = vld [vmem:[%s360 + $0x4] sm:$0xf]
      %v420 = vld [vmem:[%s360 + $0x8] sm:$0x1]
      %v421 = vld [vmem:[%s377] sm:$0xf]
      %v422 = vld [vmem:[%s377 + $0x4] sm:$0xf]
      %v423 = vld [vmem:[%s377 + $0x8] sm:$0x1]
      %p424 = scmp.gt.s32.totalorder %s21, 0
      %s425 = scalar_select %p424, 1, 0
      %v426 = vstv %s425
      %vm427 = vcmp.eq.s32.totalorder %v426, 1
      %v428 = vsel %vm427, %v418, 0
      %v429 = vsel %vm427, %v419, 0
      %v430 = vsel %vm427, %v420, 0
      %p431 = scmp.lt.s32.totalorder %s21, 1
      %s432 = scalar_select %p431, 1, 0
      %v433 = vstv %s432
      %vm434 = vcmp.eq.s32.totalorder %v433, 1
      %v435 = vsel %vm434, %v421, 0
      %v436 = vsel %vm434, %v422, 0
      %v437 = vsel %vm434, %v423, 0
      %v458 = vunpack.c.l.b16 %v428
      %v459 = vunpack.c.l.b16 %v429
      %v460 = vunpack.c.l.b16 %v394
      %v461 = vunpack.c.l.b16 %v395
      %v462 = vunpack.c.l.b16 %v397
      %v463 = vunpack.c.l.b16 %v398
      %v464 = vunpack.c.l.b16 %v400
      %v465 = vunpack.c.l.b16 %v401
      %v466 = vunpack.c.l.b16 %v403
      %v467 = vunpack.c.l.b16 %v404
      %v468 = vunpack.c.l.b16 %v406
      %v469 = vunpack.c.l.b16 %v407
      %v470 = vunpack.c.l.b16 %v409
      %v471 = vunpack.c.l.b16 %v410
      %v472 = vunpack.c.l.b16 %v412
      %v473 = vunpack.c.l.b16 %v413
      %v474 = vunpack.c.l.b16 %v415
      %v475 = vunpack.c.l.b16 %v416
      %v476 = vunpack.c.l.b16 %v435
      %v477 = vunpack.c.l.b16 %v436
      %v478 = vpack.c.b16 %v459, %v458
      %v479 = vpack.c.b16 %v461, %v460
      %v480 = vpack.c.b16 %v463, %v462
      %v481 = vpack.c.b16 %v465, %v464
      %v482 = vpack.c.b16 %v467, %v466
      %v483 = vpack.c.b16 %v469, %v468
      %v484 = vpack.c.b16 %v471, %v470
      %v485 = vpack.c.b16 %v473, %v472
      %v486 = vpack.c.b16 %v475, %v474
      %v487 = vpack.c.b16 %v477, %v476
      %v498 = vunpack.c.l.b16 %v430
      %v499 = vunpack.c.l.b16 %v396
      %v500 = vunpack.c.l.b16 %v399
      %v501 = vunpack.c.l.b16 %v402
      %v502 = vunpack.c.l.b16 %v405
      %v503 = vunpack.c.l.b16 %v408
      %v504 = vunpack.c.l.b16 %v411
      %v505 = vunpack.c.l.b16 %v414
      %v506 = vunpack.c.l.b16 %v417
      %v507 = vunpack.c.l.b16 %v437
      %v508 = vpack.c.b16 %v498, %v498
      %v509 = vpack.c.b16 %v499, %v499
      %v510 = vpack.c.b16 %v500, %v500
      %v511 = vpack.c.b16 %v501, %v501
      %v512 = vpack.c.b16 %v502, %v502
      %v513 = vpack.c.b16 %v503, %v503
      %v514 = vpack.c.b16 %v504, %v504
      %v515 = vpack.c.b16 %v505, %v505
      %v516 = vpack.c.b16 %v506, %v506
      %v517 = vpack.c.b16 %v507, %v507
      %vm518 = vsmask.f32 7424
      %v520 = vshrl.u32 %v478, 16
      %v522 = vshll.u32 %v478, 16
      %v524 = vrot.slane %v522, 1
      %v525 = vor.u32 %v520, %v524
      %v527 = vshll.u32 %v508, 16
      %v529 = vrot.slane %v527, 1
      %v530 = vsel %vm518, %v525, %v529
      %v532 = vshrl.u32 %v479, 16
      %v534 = vshll.u32 %v479, 16
      %v536 = vrot.slane %v534, 1
      %v537 = vor.u32 %v532, %v536
      %v539 = vshll.u32 %v509, 16
      %v541 = vrot.slane %v539, 1
      %v542 = vsel %vm518, %v537, %v541
      %v544 = vshrl.u32 %v480, 16
      %v546 = vshll.u32 %v480, 16
      %v548 = vrot.slane %v546, 1
      %v549 = vor.u32 %v544, %v548
      %v551 = vshll.u32 %v510, 16
      %v553 = vrot.slane %v551, 1
      %v554 = vsel %vm518, %v549, %v553
      %v556 = vshrl.u32 %v481, 16
      %v558 = vshll.u32 %v481, 16
      %v560 = vrot.slane %v558, 1
      %v561 = vor.u32 %v556, %v560
      %v563 = vshll.u32 %v511, 16
      %v565 = vrot.slane %v563, 1
      %v566 = vsel %vm518, %v561, %v565
      %v568 = vshrl.u32 %v482, 16
      %v570 = vshll.u32 %v482, 16
      %v572 = vrot.slane %v570, 1
      %v573 = vor.u32 %v568, %v572
      %v575 = vshll.u32 %v512, 16
      %v577 = vrot.slane %v575, 1
      %v578 = vsel %vm518, %v573, %v577
      %v580 = vshrl.u32 %v483, 16
      %v582 = vshll.u32 %v483, 16
      %v584 = vrot.slane %v582, 1
      %v585 = vor.u32 %v580, %v584
      %v587 = vshll.u32 %v513, 16
      %v589 = vrot.slane %v587, 1
      %v590 = vsel %vm518, %v585, %v589
      %v592 = vshrl.u32 %v484, 16
      %v594 = vshll.u32 %v484, 16
      %v596 = vrot.slane %v594, 1
      %v597 = vor.u32 %v592, %v596
      %v599 = vshll.u32 %v514, 16
      %v601 = vrot.slane %v599, 1
      %v602 = vsel %vm518, %v597, %v601
      %v604 = vshrl.u32 %v485, 16
      %v606 = vshll.u32 %v485, 16
      %v608 = vrot.slane %v606, 1
      %v609 = vor.u32 %v604, %v608
      %v611 = vshll.u32 %v515, 16
      %v613 = vrot.slane %v611, 1
      %v614 = vsel %vm518, %v609, %v613
      %v616 = vshrl.u32 %v486, 16
      %v618 = vshll.u32 %v486, 16
      %v620 = vrot.slane %v618, 1
      %v621 = vor.u32 %v616, %v620
      %v623 = vshll.u32 %v516, 16
      %v625 = vrot.slane %v623, 1
      %v626 = vsel %vm518, %v621, %v625
      %v628 = vshrl.u32 %v487, 16
      %v630 = vshll.u32 %v487, 16
      %v632 = vrot.slane %v630, 1
      %v633 = vor.u32 %v628, %v632
      %v635 = vshll.u32 %v517, 16
      %v637 = vrot.slane %v635, 1
      %v638 = vsel %vm518, %v633, %v637
      %639 = vrot.lane.b32.xlu0 %v530, 4
      %v640 = vpop.permute.xlu0 %639
      %641 = vrot.lane.b32.xlu0 %v542, 4
      %v642 = vpop.permute.xlu0 %641
      %643 = vrot.lane.b32.xlu0 %v554, 4
      %v644 = vpop.permute.xlu0 %643
      %645 = vrot.lane.b32.xlu0 %v566, 4
      %v646 = vpop.permute.xlu0 %645
      %647 = vrot.lane.b32.xlu0 %v578, 4
      %v648 = vpop.permute.xlu0 %647
      %649 = vrot.lane.b32.xlu0 %v590, 4
      %v650 = vpop.permute.xlu0 %649
      %651 = vrot.lane.b32.xlu0 %v602, 4
      %v652 = vpop.permute.xlu0 %651
      %653 = vrot.lane.b32.xlu0 %v614, 4
      %v654 = vpop.permute.xlu0 %653
      %655 = vrot.lane.b32.xlu0 %v626, 4
      %v656 = vpop.permute.xlu0 %655
      %657 = vrot.lane.b32.xlu0 %v638, 4
      %v658 = vpop.permute.xlu0 %657
      %vm659 = vcmask 1046528
      %v660 = vrot.slane %v478, 1
      %v661 = vrot.slane %v508, 1
      %v662 = vsel %vm659, %v660, %v661
      %v663 = vrot.slane %v479, 1
      %v664 = vrot.slane %v509, 1
      %v665 = vsel %vm659, %v663, %v664
      %v666 = vrot.slane %v480, 1
      %v667 = vrot.slane %v510, 1
      %v668 = vsel %vm659, %v666, %v667
      %v669 = vrot.slane %v481, 1
      %v670 = vrot.slane %v511, 1
      %v671 = vsel %vm659, %v669, %v670
      %v672 = vrot.slane %v482, 1
      %v673 = vrot.slane %v512, 1
      %v674 = vsel %vm659, %v672, %v673
      %v675 = vrot.slane %v483, 1
      %v676 = vrot.slane %v513, 1
      %v677 = vsel %vm659, %v675, %v676
      %v678 = vrot.slane %v484, 1
      %v679 = vrot.slane %v514, 1
      %v680 = vsel %vm659, %v678, %v679
      %v681 = vrot.slane %v485, 1
      %v682 = vrot.slane %v515, 1
      %v683 = vsel %vm659, %v681, %v682
      %v684 = vrot.slane %v486, 1
      %v685 = vrot.slane %v516, 1
      %v686 = vsel %vm659, %v684, %v685
      %v687 = vrot.slane %v487, 1
      %v688 = vrot.slane %v517, 1
      %v689 = vsel %vm659, %v687, %v688
      %690 = vrot.lane.b32.xlu0 %v662, 8
      %v691 = vpop.permute.xlu0 %690
      %692 = vrot.lane.b32.xlu0 %v665, 8
      %v693 = vpop.permute.xlu0 %692
      %694 = vrot.lane.b32.xlu0 %v668, 8
      %v695 = vpop.permute.xlu0 %694
      %696 = vrot.lane.b32.xlu0 %v671, 8
      %v697 = vpop.permute.xlu0 %696
      %698 = vrot.lane.b32.xlu0 %v674, 8
      %v699 = vpop.permute.xlu0 %698
      %700 = vrot.lane.b32.xlu0 %v677, 8
      %v701 = vpop.permute.xlu0 %700
      %702 = vrot.lane.b32.xlu0 %v680, 8
      %v703 = vpop.permute.xlu0 %702
      %704 = vrot.lane.b32.xlu0 %v683, 8
      %v705 = vpop.permute.xlu0 %704
      %706 = vrot.lane.b32.xlu0 %v686, 8
      %v707 = vpop.permute.xlu0 %706
      %708 = vrot.lane.b32.xlu0 %v689, 8
      %v709 = vpop.permute.xlu0 %708
      %vm710 = vcmask 31744
      %v712 = vsel %vm710, %v478, %v640
      %v714 = vsel %vm710, %v479, %v642
      %v716 = vsel %vm710, %v480, %v644
      %v718 = vsel %vm710, %v481, %v646
      %v720 = vsel %vm710, %v482, %v648
      %v722 = vsel %vm710, %v483, %v650
      %v724 = vsel %vm710, %v484, %v652
      %v726 = vsel %vm710, %v485, %v654
      %v728 = vsel %vm710, %v486, %v656
      %v730 = vsel %vm710, %v487, %v658
      %vm731 = vcmask 64512
      %v733 = vsel %vm731, %v712, %v691
      %v735 = vsel %vm731, %v714, %v693
      %v737 = vsel %vm731, %v716, %v695
      %v739 = vsel %vm731, %v718, %v697
      %v741 = vsel %vm731, %v720, %v699
      %v743 = vsel %vm731, %v722, %v701
      %v745 = vsel %vm731, %v724, %v703
      %v747 = vsel %vm731, %v726, %v705
      %v749 = vsel %vm731, %v728, %v707
      %v751 = vsel %vm731, %v730, %v709
      %vm752 = vcmask 97280
      %v754 = vsel %vm752, %v733, 0
      %v755 = vsel %vm752, %v735, 0
      %v756 = vsel %vm752, %v737, 0
      %v757 = vsel %vm752, %v739, 0
      %v758 = vsel %vm752, %v741, 0
      %v759 = vsel %vm752, %v743, 0
      %v760 = vsel %vm752, %v745, 0
      %v761 = vsel %vm752, %v747, 0
      %v762 = vsel %vm752, %v749, 0
      %v763 = vsel %vm752, %v751, 0
      %v764 = vld [vmem:[%s3] sm:$0xf]
      %v765 = vld [vmem:[%s3 + $0x4] sm:$0xf]
      %s766 = scalar_lea.vmem %s3, 8
      %v767 = vld [vmem:[%s766] sm:$0xf]
      %v768 = vld [vmem:[%s766 + $0x4] sm:$0xf]
      %v771 = vunpack.c.l.b16 %v767
      %v772 = vunpack.c.l.b16 %v768
      %v773 = vpack.c.b16 %v772, %v771
      %vm775 = vcmask 130048
      %v776 = vsel %vm775, %v755, 0
      %v778 = vsel %vm775, %v756, 0
      %v780 = vsel %vm775, %v757, 0
      %v782 = vsel %vm775, %v758, 0
      %v784 = vsel %vm775, %v759, 0
      %v786 = vsel %vm775, %v760, 0
      %v788 = vsel %vm775, %v761, 0
      %v790 = vsel %vm775, %v762, 0
      %792 = vmatprep.subr.bf16.mxu0 0
      %793 = vmatpush1.bf16.msra.mxu0 0
      %794 = vmatprep.subr.bf16.mxu0 0
      %795 = vmatpush1.bf16.msra.mxu0 0
      %796 = vmatprep.subr.bf16.mxu0 0
      %797 = vmatpush1.bf16.msra.mxu0 0
      %798 = vmatprep.subr.bf16.mxu0 0
      %799 = vmatpush1.bf16.msra.mxu0 0
      %800 = vmatprep.subr.bf16.mxu0 0
      %801 = vmatpush1.bf16.msra.mxu0 0
      %802 = vmatprep.subr.bf16.mxu0 0
      %803 = vmatpush1.bf16.msra.mxu0 0
      %804 = vmatprep.subr.bf16.mxu0 0
      %805 = vmatpush1.bf16.msra.mxu0 0
      %806 = vmatprep.subr.bf16.mxu0 0
      %807 = vmatpush1.bf16.msra.mxu0 %v773
      %808 = vmatprep.subr.bf16.mxu0 0
      %809 = vmatpush2.bf16.msra.mxu0 0
      %810 = vmatprep.subr.bf16.mxu0 0
      %811 = vmatpush2.bf16.msra.mxu0 0
      %812 = vmatprep.subr.bf16.mxu0 0
      %813 = vmatpush2.bf16.msra.mxu0 0
      %814 = vmatprep.subr.bf16.mxu0 0
      %815 = vmatpush2.bf16.msra.mxu0 0
      %816 = vmatprep.subr.bf16.mxu0 0
      %817 = vmatpush2.bf16.msra.mxu0 0
      %818 = vmatprep.subr.bf16.mxu0 0
      %819 = vmatpush2.bf16.msra.mxu0 0
      %820 = vmatprep.subr.bf16.mxu0 0
      %821 = vmatpush2.bf16.msra.mxu0 0
      %822 = vmatprep.subr.bf16.mxu0 0
      %823 = vmatpush2.bf16.msra.mxu0 0
      %824 = vmatprep.mubr.bf16.mxu0 0
      %825 = vmatmul.mubr.bf16.gmra.mxu0 %v776
      %v826 = vpop.f32.mrf.mxu0
      %v827 = vadd.f32 0.0, %v826
      %v828 = vpop.f32.mrf.mxu0
      %v829 = vpop.f32.mrf.mxu0
      %v830 = vadd.f32 0.0, %v829
      %v831 = vpop.f32.mrf.mxu0
      %832 = vmatprep.mubr.bf16.mxu0 0
      %833 = vmatmul.mubr.bf16.gmra.mxu0 %v778
      %v834 = vpop.f32.mrf.mxu0
      %v835 = vadd.f32 0.0, %v834
      %v836 = vpop.f32.mrf.mxu0
      %v837 = vpop.f32.mrf.mxu0
      %v838 = vadd.f32 0.0, %v837
      %v839 = vpop.f32.mrf.mxu0
      %840 = vmatprep.mubr.bf16.mxu0 0
      %841 = vmatmul.mubr.bf16.gmra.mxu0 %v780
      %v842 = vpop.f32.mrf.mxu0
      %v843 = vadd.f32 0.0, %v842
      %v844 = vpop.f32.mrf.mxu0
      %v845 = vpop.f32.mrf.mxu0
      %v846 = vadd.f32 0.0, %v845
      %v847 = vpop.f32.mrf.mxu0
      %848 = vmatprep.mubr.bf16.mxu0 0
      %849 = vmatmul.mubr.bf16.gmra.mxu0 %v782
      %v850 = vpop.f32.mrf.mxu0
      %v851 = vadd.f32 0.0, %v850
      %v852 = vpop.f32.mrf.mxu0
      %v853 = vpop.f32.mrf.mxu0
      %v854 = vadd.f32 0.0, %v853
      %v855 = vpop.f32.mrf.mxu0
      %856 = vmatprep.mubr.bf16.mxu0 0
      %857 = vmatmul.mubr.bf16.gmra.mxu0 %v784
      %v858 = vpop.f32.mrf.mxu0
      %v859 = vadd.f32 0.0, %v858
      %v860 = vpop.f32.mrf.mxu0
      %v861 = vpop.f32.mrf.mxu0
      %v862 = vadd.f32 0.0, %v861
      %v863 = vpop.f32.mrf.mxu0
      %864 = vmatprep.mubr.bf16.mxu0 0
      %865 = vmatmul.mubr.bf16.gmra.mxu0 %v786
      %v866 = vpop.f32.mrf.mxu0
      %v867 = vadd.f32 0.0, %v866
      %v868 = vpop.f32.mrf.mxu0
      %v869 = vpop.f32.mrf.mxu0
      %v870 = vadd.f32 0.0, %v869
      %v871 = vpop.f32.mrf.mxu0
      %872 = vmatprep.mubr.bf16.mxu0 0
      %873 = vmatmul.mubr.bf16.gmra.mxu0 %v788
      %v874 = vpop.f32.mrf.mxu0
      %v875 = vadd.f32 0.0, %v874
      %v876 = vpop.f32.mrf.mxu0
      %v877 = vpop.f32.mrf.mxu0
      %v878 = vadd.f32 0.0, %v877
      %v879 = vpop.f32.mrf.mxu0
      %880 = vmatprep.mubr.bf16.mxu0 0
      %881 = vmatmul.mubr.bf16.gmra.mxu0 %v790
      %v882 = vpop.f32.mrf.mxu0
      %v883 = vadd.f32 0.0, %v882
      %v884 = vpop.f32.mrf.mxu0
      %v885 = vpop.f32.mrf.mxu0
      %v886 = vadd.f32 0.0, %v885
      %v887 = vpop.f32.mrf.mxu0
      %888 = vdwg.mxu0
      %v891 = vunpack.c.l.b16 %v764
      %v892 = vunpack.c.l.b16 %v765
      %v893 = vpack.c.b16 %v892, %v891
      %v895 = vsel %vm775, %v754, 0
      %897 = vmatprep.subr.bf16.mxu0 0
      %898 = vmatpush1.bf16.msra.mxu0 0
      %899 = vmatprep.subr.bf16.mxu0 0
      %900 = vmatpush1.bf16.msra.mxu0 0
      %901 = vmatprep.subr.bf16.mxu0 0
      %902 = vmatpush1.bf16.msra.mxu0 0
      %903 = vmatprep.subr.bf16.mxu0 0
      %904 = vmatpush1.bf16.msra.mxu0 0
      %905 = vmatprep.subr.bf16.mxu0 0
      %906 = vmatpush1.bf16.msra.mxu0 0
      %907 = vmatprep.subr.bf16.mxu0 0
      %908 = vmatpush1.bf16.msra.mxu0 0
      %909 = vmatprep.subr.bf16.mxu0 0
      %910 = vmatpush1.bf16.msra.mxu0 0
      %911 = vmatprep.subr.bf16.mxu0 0
      %912 = vmatpush1.bf16.msra.mxu0 %v893
      %913 = vmatprep.subr.bf16.mxu0 0
      %914 = vmatpush2.bf16.msra.mxu0 0
      %915 = vmatprep.subr.bf16.mxu0 0
      %916 = vmatpush2.bf16.msra.mxu0 0
      %917 = vmatprep.subr.bf16.mxu0 0
      %918 = vmatpush2.bf16.msra.mxu0 0
      %919 = vmatprep.subr.bf16.mxu0 0
      %920 = vmatpush2.bf16.msra.mxu0 0
      %921 = vmatprep.subr.bf16.mxu0 0
      %922 = vmatpush2.bf16.msra.mxu0 0
      %923 = vmatprep.subr.bf16.mxu0 0
      %924 = vmatpush2.bf16.msra.mxu0 0
      %925 = vmatprep.subr.bf16.mxu0 0
      %926 = vmatpush2.bf16.msra.mxu0 0
      %927 = vmatprep.subr.bf16.mxu0 0
      %928 = vmatpush2.bf16.msra.mxu0 0
      %929 = vmatprep.mubr.bf16.mxu0 0
      %930 = vmatmul.mubr.bf16.gmra.mxu0 %v895
      %v931 = vpop.f32.mrf.mxu0
      %v932 = vadd.f32 %v827, %v931
      %v933 = vpop.f32.mrf.mxu0
      %v934 = vpop.f32.mrf.mxu0
      %v935 = vadd.f32 %v830, %v934
      %v936 = vpop.f32.mrf.mxu0
      %937 = vmatprep.mubr.bf16.mxu0 0
      %938 = vmatmul.mubr.bf16.gmra.mxu0 %v776
      %v939 = vpop.f32.mrf.mxu0
      %v940 = vadd.f32 %v835, %v939
      %v941 = vpop.f32.mrf.mxu0
      %v942 = vpop.f32.mrf.mxu0
      %v943 = vadd.f32 %v838, %v942
      %v944 = vpop.f32.mrf.mxu0
      %945 = vmatprep.mubr.bf16.mxu0 0
      %946 = vmatmul.mubr.bf16.gmra.mxu0 %v778
      %v947 = vpop.f32.mrf.mxu0
      %v948 = vadd.f32 %v843, %v947
      %v949 = vpop.f32.mrf.mxu0
      %v950 = vpop.f32.mrf.mxu0
      %v951 = vadd.f32 %v846, %v950
      %v952 = vpop.f32.mrf.mxu0
      %953 = vmatprep.mubr.bf16.mxu0 0
      %954 = vmatmul.mubr.bf16.gmra.mxu0 %v780
      %v955 = vpop.f32.mrf.mxu0
      %v956 = vadd.f32 %v851, %v955
      %v957 = vpop.f32.mrf.mxu0
      %v958 = vpop.f32.mrf.mxu0
      %v959 = vadd.f32 %v854, %v958
      %v960 = vpop.f32.mrf.mxu0
      %961 = vmatprep.mubr.bf16.mxu0 0
      %962 = vmatmul.mubr.bf16.gmra.mxu0 %v782
      %v963 = vpop.f32.mrf.mxu0
      %v964 = vadd.f32 %v859, %v963
      %v965 = vpop.f32.mrf.mxu0
      %v966 = vpop.f32.mrf.mxu0
      %v967 = vadd.f32 %v862, %v966
      %v968 = vpop.f32.mrf.mxu0
      %969 = vmatprep.mubr.bf16.mxu0 0
      %970 = vmatmul.mubr.bf16.gmra.mxu0 %v784
      %v971 = vpop.f32.mrf.mxu0
      %v972 = vadd.f32 %v867, %v971
      %v973 = vpop.f32.mrf.mxu0
      %v974 = vpop.f32.mrf.mxu0
      %v975 = vadd.f32 %v870, %v974
      %v976 = vpop.f32.mrf.mxu0
      %977 = vmatprep.mubr.bf16.mxu0 0
      %978 = vmatmul.mubr.bf16.gmra.mxu0 %v786
      %v979 = vpop.f32.mrf.mxu0
      %v980 = vadd.f32 %v875, %v979
      %v981 = vpop.f32.mrf.mxu0
      %v982 = vpop.f32.mrf.mxu0
      %v983 = vadd.f32 %v878, %v982
      %v984 = vpop.f32.mrf.mxu0
      %985 = vmatprep.mubr.bf16.mxu0 0
      %986 = vmatmul.mubr.bf16.gmra.mxu0 %v788
      %v987 = vpop.f32.mrf.mxu0
      %v988 = vadd.f32 %v883, %v987
      %v989 = vpop.f32.mrf.mxu0
      %v990 = vpop.f32.mrf.mxu0
      %v991 = vadd.f32 %v886, %v990
      %v992 = vpop.f32.mrf.mxu0
      %993 = vdwg.mxu0
      %s994 = scalar_lea.vmem %s3, 16
      %v995 = vld [vmem:[%s994] sm:$0xf]
      %v996 = vld [vmem:[%s994 + $0x4] sm:$0xf]
      %v999 = vunpack.c.l.b16 %v995
      %v1000 = vunpack.c.l.b16 %v996
      %v1001 = vpack.c.b16 %v1000, %v999
      %v1003 = vsel %vm775, %v763, 0
      %1005 = vmatprep.subr.bf16.mxu0 0
      %1006 = vmatpush1.bf16.msra.mxu0 0
      %1007 = vmatprep.subr.bf16.mxu0 0
      %1008 = vmatpush1.bf16.msra.mxu0 0
      %1009 = vmatprep.subr.bf16.mxu0 0
      %1010 = vmatpush1.bf16.msra.mxu0 0
      %1011 = vmatprep.subr.bf16.mxu0 0
      %1012 = vmatpush1.bf16.msra.mxu0 0
      %1013 = vmatprep.subr.bf16.mxu0 0
      %1014 = vmatpush1.bf16.msra.mxu0 0
      %1015 = vmatprep.subr.bf16.mxu0 0
      %1016 = vmatpush1.bf16.msra.mxu0 0
      %1017 = vmatprep.subr.bf16.mxu0 0
      %1018 = vmatpush1.bf16.msra.mxu0 0
      %1019 = vmatprep.subr.bf16.mxu0 0
      %1020 = vmatpush1.bf16.msra.mxu0 %v1001
      %1021 = vmatprep.subr.bf16.mxu0 0
      %1022 = vmatpush2.bf16.msra.mxu0 0
      %1023 = vmatprep.subr.bf16.mxu0 0
      %1024 = vmatpush2.bf16.msra.mxu0 0
      %1025 = vmatprep.subr.bf16.mxu0 0
      %1026 = vmatpush2.bf16.msra.mxu0 0
      %1027 = vmatprep.subr.bf16.mxu0 0
      %1028 = vmatpush2.bf16.msra.mxu0 0
      %1029 = vmatprep.subr.bf16.mxu0 0
      %1030 = vmatpush2.bf16.msra.mxu0 0
      %1031 = vmatprep.subr.bf16.mxu0 0
      %1032 = vmatpush2.bf16.msra.mxu0 0
      %1033 = vmatprep.subr.bf16.mxu0 0
      %1034 = vmatpush2.bf16.msra.mxu0 0
      %1035 = vmatprep.subr.bf16.mxu0 0
      %1036 = vmatpush2.bf16.msra.mxu0 0
      %1037 = vmatprep.mubr.bf16.mxu0 0
      %1038 = vmatmul.mubr.bf16.gmra.mxu0 %v778
      %v1039 = vpop.f32.mrf.mxu0
      %v1040 = vadd.f32 0.0, %v1039
      %v1041 = vpop.f32.mrf.mxu0
      %v1042 = vpop.f32.mrf.mxu0
      %v1043 = vadd.f32 0.0, %v1042
      %v1044 = vpop.f32.mrf.mxu0
      %1045 = vmatprep.mubr.bf16.mxu0 0
      %1046 = vmatmul.mubr.bf16.gmra.mxu0 %v780
      %v1047 = vpop.f32.mrf.mxu0
      %v1048 = vadd.f32 0.0, %v1047
      %v1049 = vpop.f32.mrf.mxu0
      %v1050 = vpop.f32.mrf.mxu0
      %v1051 = vadd.f32 0.0, %v1050
      %v1052 = vpop.f32.mrf.mxu0
      %1053 = vmatprep.mubr.bf16.mxu0 0
      %1054 = vmatmul.mubr.bf16.gmra.mxu0 %v782
      %v1055 = vpop.f32.mrf.mxu0
      %v1056 = vadd.f32 0.0, %v1055
      %v1057 = vpop.f32.mrf.mxu0
      %v1058 = vpop.f32.mrf.mxu0
      %v1059 = vadd.f32 0.0, %v1058
      %v1060 = vpop.f32.mrf.mxu0
      %1061 = vmatprep.mubr.bf16.mxu0 0
      %1062 = vmatmul.mubr.bf16.gmra.mxu0 %v784
      %v1063 = vpop.f32.mrf.mxu0
      %v1064 = vadd.f32 0.0, %v1063
      %v1065 = vpop.f32.mrf.mxu0
      %v1066 = vpop.f32.mrf.mxu0
      %v1067 = vadd.f32 0.0, %v1066
      %v1068 = vpop.f32.mrf.mxu0
      %1069 = vmatprep.mubr.bf16.mxu0 0
      %1070 = vmatmul.mubr.bf16.gmra.mxu0 %v786
      %v1071 = vpop.f32.mrf.mxu0
      %v1072 = vadd.f32 0.0, %v1071
      %v1073 = vpop.f32.mrf.mxu0
      %v1074 = vpop.f32.mrf.mxu0
      %v1075 = vadd.f32 0.0, %v1074
      %v1076 = vpop.f32.mrf.mxu0
      %1077 = vmatprep.mubr.bf16.mxu0 0
      %1078 = vmatmul.mubr.bf16.gmra.mxu0 %v788
      %v1079 = vpop.f32.mrf.mxu0
      %v1080 = vadd.f32 0.0, %v1079
      %v1081 = vpop.f32.mrf.mxu0
      %v1082 = vpop.f32.mrf.mxu0
      %v1083 = vadd.f32 0.0, %v1082
      %v1084 = vpop.f32.mrf.mxu0
      %1085 = vmatprep.mubr.bf16.mxu0 0
      %1086 = vmatmul.mubr.bf16.gmra.mxu0 %v790
      %v1087 = vpop.f32.mrf.mxu0
      %v1088 = vadd.f32 0.0, %v1087
      %v1089 = vpop.f32.mrf.mxu0
      %v1090 = vpop.f32.mrf.mxu0
      %v1091 = vadd.f32 0.0, %v1090
      %v1092 = vpop.f32.mrf.mxu0
      %1093 = vmatprep.mubr.bf16.mxu0 0
      %1094 = vmatmul.mubr.bf16.gmra.mxu0 %v1003
      %v1095 = vpop.f32.mrf.mxu0
      %v1096 = vadd.f32 0.0, %v1095
      %v1097 = vpop.f32.mrf.mxu0
      %v1098 = vpop.f32.mrf.mxu0
      %v1099 = vadd.f32 0.0, %v1098
      %v1100 = vpop.f32.mrf.mxu0
      %1101 = vdwg.mxu0
      %v1102 = vadd.f32 %v932, %v1040
      %v1103 = vadd.f32 %v935, %v1043
      %v1104 = vadd.f32 %v940, %v1048
      %v1105 = vadd.f32 %v943, %v1051
      %v1106 = vadd.f32 %v948, %v1056
      %v1107 = vadd.f32 %v951, %v1059
      %v1108 = vadd.f32 %v956, %v1064
      %v1109 = vadd.f32 %v959, %v1067
      %v1110 = vadd.f32 %v964, %v1072
      %v1111 = vadd.f32 %v967, %v1075
      %v1112 = vadd.f32 %v972, %v1080
      %v1113 = vadd.f32 %v975, %v1083
      %v1114 = vadd.f32 %v980, %v1088
      %v1115 = vadd.f32 %v983, %v1091
      %v1116 = vadd.f32 %v988, %v1096
      %v1117 = vadd.f32 %v991, %v1099
      %v1118 = vld [vmem:[%s4] sm:$0x1]
      %v1120 = vlaneseq
      %v1121 = vshrl.u32 %v1120, 7
      %v1122 = vsub.s32 0, %v1121
      %v1123 = vrot.slane %v1118, %v1122
      %v1125 = vadd.f32 %v1102, %v1123
      %v1126 = vadd.f32 %v1103, %v1123
      %v1127 = vadd.f32 %v1104, %v1123
      %v1128 = vadd.f32 %v1105, %v1123
      %v1129 = vadd.f32 %v1106, %v1123
      %v1130 = vadd.f32 %v1107, %v1123
      %v1131 = vadd.f32 %v1108, %v1123
      %v1132 = vadd.f32 %v1109, %v1123
      %v1133 = vadd.f32 %v1110, %v1123
      %v1134 = vadd.f32 %v1111, %v1123
      %v1135 = vadd.f32 %v1112, %v1123
      %v1136 = vadd.f32 %v1113, %v1123
      %v1137 = vadd.f32 %v1114, %v1123
      %v1138 = vadd.f32 %v1115, %v1123
      %v1139 = vadd.f32 %v1116, %v1123
      %v1140 = vadd.f32 %v1117, %v1123
      %v1141 = vmax.f32 %v1125, 0.0
      %v1142 = vmax.f32 %v1126, 0.0
      %v1143 = vmax.f32 %v1127, 0.0
      %v1144 = vmax.f32 %v1128, 0.0
      %v1145 = vmax.f32 %v1129, 0.0
      %v1146 = vmax.f32 %v1130, 0.0
      %v1147 = vmax.f32 %v1131, 0.0
      %v1148 = vmax.f32 %v1132, 0.0
      %v1149 = vmax.f32 %v1133, 0.0
      %v1150 = vmax.f32 %v1134, 0.0
      %v1151 = vmax.f32 %v1135, 0.0
      %v1152 = vmax.f32 %v1136, 0.0
      %v1153 = vmax.f32 %v1137, 0.0
      %v1154 = vmax.f32 %v1138, 0.0
      %v1155 = vmax.f32 %v1139, 0.0
      %v1156 = vmax.f32 %v1140, 0.0
      %v1157 = vpack.c.bf16 %v1142, %v1141
      %v1158 = vpack.c.bf16 %v1144, %v1143
      %v1159 = vpack.c.bf16 %v1146, %v1145
      %v1160 = vpack.c.bf16 %v1148, %v1147
      %v1161 = vpack.c.bf16 %v1150, %v1149
      %v1162 = vpack.c.bf16 %v1152, %v1151
      %v1163 = vpack.c.bf16 %v1154, %v1153
      %v1164 = vpack.c.bf16 %v1156, %v1155
      %v1173 = vunpack.c.l.b16 %v1157
      %v1174 = vunpack.c.h.b16 %v1157
      %v1175 = vunpack.c.l.b16 %v1158
      %v1176 = vunpack.c.h.b16 %v1158
      %v1177 = vunpack.c.l.b16 %v1159
      %v1178 = vunpack.c.h.b16 %v1159
      %v1179 = vunpack.c.l.b16 %v1160
      %v1180 = vunpack.c.h.b16 %v1160
      %v1181 = vunpack.c.l.b16 %v1161
      %v1182 = vunpack.c.h.b16 %v1161
      %v1183 = vunpack.c.l.b16 %v1162
      %v1184 = vunpack.c.h.b16 %v1162
      %v1185 = vunpack.c.l.b16 %v1163
      %v1186 = vunpack.c.h.b16 %v1163
      %v1187 = vunpack.c.l.b16 %v1164
      %v1188 = vunpack.c.h.b16 %v1164
      %v1189 = vpack.c.b16 %v1173, %v1173
      %v1190 = vpack.c.b16 %v1174, %v1174
      %v1191 = vpack.c.b16 %v1175, %v1175
      %v1192 = vpack.c.b16 %v1176, %v1176
      %v1193 = vpack.c.b16 %v1177, %v1177
      %v1194 = vpack.c.b16 %v1178, %v1178
      %v1195 = vpack.c.b16 %v1179, %v1179
      %v1196 = vpack.c.b16 %v1180, %v1180
      %v1197 = vpack.c.b16 %v1181, %v1181
      %v1198 = vpack.c.b16 %v1182, %v1182
      %v1199 = vpack.c.b16 %v1183, %v1183
      %v1200 = vpack.c.b16 %v1184, %v1184
      %v1201 = vpack.c.b16 %v1185, %v1185
      %v1202 = vpack.c.b16 %v1186, %v1186
      %v1203 = vpack.c.b16 %v1187, %v1187
      %v1204 = vpack.c.b16 %v1188, %v1188
      %vm1221 = vcmask 60416
      %1222 = vst.msk [vmem:[%s391] sm:$0xf] %vm1221, %v1189
      %1223 = vst.msk [vmem:[%s391 + $0x4] sm:$0xf] %vm1221, %v1190
      %1224 = vst.msk [vmem:[%s391 + $0x8] sm:$0xf] %vm1221, %v1191
      %1225 = vst.msk [vmem:[%s391 + $0xc] sm:$0xf] %vm1221, %v1192
      %1226 = vst.msk [vmem:[%s391 + $0x10] sm:$0xf] %vm1221, %v1193
      %1227 = vst.msk [vmem:[%s391 + $0x14] sm:$0xf] %vm1221, %v1194
      %1228 = vst.msk [vmem:[%s391 + $0x18] sm:$0xf] %vm1221, %v1195
      %1229 = vst.msk [vmem:[%s391 + $0x1c] sm:$0xf] %vm1221, %v1196
      %1230 = vst.msk [vmem:[%s391 + $0x20] sm:$0xf] %vm1221, %v1197
      %1231 = vst.msk [vmem:[%s391 + $0x24] sm:$0xf] %vm1221, %v1198
      %1232 = vst.msk [vmem:[%s391 + $0x28] sm:$0xf] %vm1221, %v1199
      %1233 = vst.msk [vmem:[%s391 + $0x2c] sm:$0xf] %vm1221, %v1200
      %1234 = vst.msk [vmem:[%s391 + $0x30] sm:$0xf] %vm1221, %v1201
      %1235 = vst.msk [vmem:[%s391 + $0x34] sm:$0xf] %vm1221, %v1202
      %1236 = vst.msk [vmem:[%s391 + $0x38] sm:$0xf] %vm1221, %v1203
      %1237 = vst.msk [vmem:[%s391 + $0x3c] sm:$0xf] %vm1221, %v1204
      %s1238 = smul.u32 8, %s21
      %p1239 = scmp.lt.s32.totalorder %s20, 1
      %s1240 = scalar_select %p1239, %s20, 1
      %p1241 = scmp.lt.s32.totalorder %s1238, 15
      %s1242 = scalar_select %p1241, %s1238, 15
      %s1243 = smul.addr %s1242, 2
      %s1244 = smul.addr %s1240, 32
      %s1245 = sadd.s32 %s1243, %s1244
      %s1246 = smul.addr %s1245, 4
      %s1247 = scalar_lea.vmem %s5, %s1246
      // Predicated region
      $region41: #{_conv_relu_impl.1} parent=39 // pred_check
        %p1248 = pneg %p190
      $region42: #{_conv_relu_impl.1} parent=39 // pred_check_branch
        %1250 = sbr.rel (%p1248) target = $region44
      $region43: #{_conv_relu_impl.1} parent=39 // pred_region
        %s1251 = smul.u32 8, %s21
      $region44: #{_conv_relu_impl.1} parent=39 // pred_fallthru
        _
    $region40: #{_conv_relu_impl.1} parent=5 // pred_fallthru
      _
    %p1252 = scmp.le.s32.totalorder 2, %s11
    // Predicated region
    $region45: #{_conv_relu_impl.1} parent=5 // pred_check
      %p1253 = pneg %p1252
    $region46: #{_conv_relu_impl.1} parent=5 // pred_check_branch
      %1255 = sbr.rel (%p1253) target = $region48
    $region47: #{_conv_relu_impl.1} parent=5 // pred_region
      %s1256 = ssub.s32 %s11, 2
      // Predicated region
      $region49: #{_conv_relu_impl.1} parent=47 // pred_check
        %p1257 = pneg %p196
      $region50: #{_conv_relu_impl.1} parent=47 // pred_check_branch
        %1259 = sbr.rel (%p1257) target = $region52
      $region51: #{_conv_relu_impl.1} parent=47 // pred_region
        %s1260 = smul.u32 8, %s23
        %p1261 = scmp.lt.s32.totalorder %s22, 1
        %s1262 = scalar_select %p1261, %s22, 1
        %p1263 = scmp.lt.s32.totalorder %s1260, 15
        %s1264 = scalar_select %p1263, %s1260, 15
        %s1265 = smul.addr %s1264, 2
        %s1266 = smul.addr %s1262, 32
        %s1267 = sadd.s32 %s1265, %s1266
        %s1268 = smul.addr %s1267, 4
        %s1269 = scalar_lea.vmem %s5, %s1268
      $region52: #{_conv_relu_impl.1} parent=47 // pred_fallthru
        _
    $region48: #{_conv_relu_impl.1} parent=5 // pred_fallthru
      _
  $region6: #{_conv_relu_impl.1} parent=0 // loop_footer
    %s15 = sadd.s32 1, %s11
  $region7: #{_conv_relu_impl.1} parent=0 // loop_footer_branch
    %10 = sbr.rel target = $region3
  $region8: #{_conv_relu_impl.1} parent=0 // loop_exit
    _

</llo_original>
